<compile_context>
chip_gen: v7x
topology: tpu7x:2x2x1
jax: 0.10.0
libtpu: 0.0.40
codegen_flags: <defaults>
</compile_context>

<pallas_src>
import functools

import jax
import jax.numpy as jnp
from jax.experimental import pallas as pl
from jax.experimental.pallas import tpu as pltpu

# "hyperparams" of the original module, fixed deterministically here.
STATE_DIM = 16
ACTION_DIM = 8
HIDDEN_SIZE = 32        # hyperparams['hidden_layer_size']
GRU_HIDDEN = 32         # hyperparams['lstm_hidden_size']
NUM_LAYERS = 2          # hyperparams['lstm_num_layers']
BATCH = 8               # small demo batch (kernel is batch-generic)

LANE = 128              # lane-dense output width
MAX_B_TILE = 512        # rows per grid step for large batches (VMEM use ~0.6 MiB/tile)


def _round_up(n, m):
    return ((n + m - 1) // m) * m


def _policy_gru_kernel(x_ref, w_ref, b_ref, out_ref, *, num_layers,
                       state_dim, hidden_size, gru_hidden, action_dim,
                       out_width):
    """One batch tile of the whole forward pass.

    Weight slab (bf16) rows: [W1^T | Wih0^T | Wih1^T | W2^T], each block
    starting at lane 0.  Bias slab (f32) rows:
      0            : b1
      1 + 2l       : [bir+bhr | biz+bhz | bin]   (folded gate bias, 3H lanes)
      2 + 2l       : b_hn                        (H lanes)
      1 + 2L       : b2
    """
    H = gru_hidden

    # fc1 + relu (bf16 operands on the MXU, f32 accumulate / elementwise).
    x = x_ref[...].astype(jnp.bfloat16)
    w1 = w_ref[0:state_dim, 0:hidden_size]
    b1 = b_ref[0:1, 0:hidden_size]
    inp = jnp.maximum(
        jnp.dot(x, w1, preferred_element_type=jnp.float32) + b1, 0.0)

    # GRU: single timestep, zero initial hidden state per layer.
    pieces = []
    row = state_dim
    for l in range(num_layers):
        in_l = hidden_size if l == 0 else H
        wih = w_ref[row:row + in_l, 0:3 * H]              # gate order: r, z, n
        row += in_l
        b_gate = b_ref[1 + 2 * l:2 + 2 * l, 0:3 * H]      # r/z biases pre-folded
        b_hn = b_ref[2 + 2 * l:3 + 2 * l, 0:H]

        # Single bias add over the full (bt, 3H) pre-activation, then one
        # sigmoid over the 2H-wide r|z slab.
        gi = jnp.dot(inp.astype(jnp.bfloat16), wih,
                     preferred_element_type=jnp.float32) + b_gate
        rz = jax.nn.sigmoid(gi[:, 0:2 * H])
        r = rz[:, 0:H]
        z = rz[:, H:2 * H]
        # h_prev == 0  =>  Whh @ h_prev == 0; hidden-side n pre-activation is
        # exactly b_hn, and the `z * h_prev` term vanishes.
        n = jnp.tanh(gi[:, 2 * H:3 * H] + r * b_hn)
        h_new = (1.0 - z) * n
        pieces.append(h_new)
        inp = h_new

    # fc2 + softmax (numerically stable, exact division — EUP slot has slack).
    w2 = w_ref[row:row + H, 0:action_dim]
    b2 = b_ref[1 + 2 * num_layers:2 + 2 * num_layers, 0:action_dim]
    logits = jnp.dot(inp.astype(jnp.bfloat16), w2,
                     preferred_element_type=jnp.float32) + b2
    m = jnp.max(logits, axis=-1, keepdims=True)
    e = jnp.exp(logits - m)
    probs = e / jnp.sum(e, axis=-1, keepdims=True)
    pieces.append(probs)

    # Single lane-dense, unmasked 128-lane store:
    #   [hidden_0 | ... | hidden_{L-1} | probs | don't-care pad].
    # The pad lanes are never read by the wrapper, so fill them by recycling
    # live vregs instead of materializing a (bt, pad) zeros block.
    live_w = num_layers * H + action_dim
    pad = out_width - live_w
    if pad > 0:
        pad_pieces, fill, idx = [], pad, 0
        while fill > 0:
            src = pieces[idx % len(pieces)]
            take = min(src.shape[1], fill)
            pad_pieces.append(src[:, 0:take])
            fill -= take
            idx += 1
        pieces = pieces + pad_pieces
    out_ref[...] = jnp.concatenate(pieces, axis=-1)


def init_params(key):
    """Deterministic PyTorch-style uniform init (shapes match nn.Module.__init__)."""
    def uniform(key, shape, fan_in):
        bound = 1.0 / jnp.sqrt(jnp.float32(fan_in))
        return jax.random.uniform(key, shape, jnp.float32, -bound, bound)

    keys = jax.random.split(key, 4 + 4 * NUM_LAYERS)
    p = {}
    p["fc1_w"] = uniform(keys[0], (HIDDEN_SIZE, STATE_DIM), STATE_DIM)
    p["fc1_b"] = uniform(keys[1], (HIDDEN_SIZE,), STATE_DIM)
    for l in range(NUM_LAYERS):
        in_l = HIDDEN_SIZE if l == 0 else GRU_HIDDEN
        # w_hh exists in the module but is mathematically dead for this forward
        # path (h0 == 0, seq_len == 1); kept for parameter fidelity, never
        # packed / shipped to the kernel.
        p[f"w_ih_{l}"] = uniform(keys[2 + 4 * l], (3 * GRU_HIDDEN, in_l), GRU_HIDDEN)
        p[f"w_hh_{l}"] = uniform(keys[3 + 4 * l], (3 * GRU_HIDDEN, GRU_HIDDEN), GRU_HIDDEN)
        p[f"b_ih_{l}"] = uniform(keys[4 + 4 * l], (3 * GRU_HIDDEN,), GRU_HIDDEN)
        p[f"b_hh_{l}"] = uniform(keys[5 + 4 * l], (3 * GRU_HIDDEN,), GRU_HIDDEN)
    p["fc2_w"] = uniform(keys[2 + 4 * NUM_LAYERS], (ACTION_DIM, GRU_HIDDEN), GRU_HIDDEN)
    p["fc2_b"] = uniform(keys[3 + 4 * NUM_LAYERS], (ACTION_DIM,), GRU_HIDDEN)
    return p


def pack_params(params):
    """One-time packing of all live weights/biases into two aligned slabs.

    Weight slab (bf16, row-stacked, each block at lane 0, row offsets multiples
    of 16 for bf16 sublane packing):
        rows [0:16)   W1^T    (STATE_DIM, HIDDEN_SIZE)
        rows [16:48)  Wih0^T  (HIDDEN_SIZE, 3*GRU_HIDDEN)
        rows [48:80)  Wih1^T  (GRU_HIDDEN, 3*GRU_HIDDEN)
        rows [80:112) W2^T    (GRU_HIDDEN, ACTION_DIM)
    Bias slab (f32) rows: [b1, gate_bias_0, bhn_0, gate_bias_1, bhn_1, b2, 0, 0]
    where gate_bias_l = [bir+bhr | biz+bhz | bin] (r/z hidden biases folded —
    exact, since they are summed before the sigmoid).
    """
    H = GRU_HIDDEN
    k_rows = STATE_DIM + HIDDEN_SIZE + GRU_HIDDEN * (NUM_LAYERS - 1) + GRU_HIDDEN
    w = jnp.zeros((_round_up(k_rows, 16), LANE), jnp.float32)
    row = 0
    w = w.at[row:row + STATE_DIM, 0:HIDDEN_SIZE].set(params["fc1_w"].T)
    row += STATE_DIM
    for l in range(NUM_LAYERS):
        in_l = HIDDEN_SIZE if l == 0 else GRU_HIDDEN
        w = w.at[row:row + in_l, 0:3 * H].set(params[f"w_ih_{l}"].T)
        row += in_l
    w = w.at[row:row + H, 0:ACTION_DIM].set(params["fc2_w"].T)

    b = jnp.zeros((_round_up(2 + 2 * NUM_LAYERS, 8), LANE), jnp.float32)
    b = b.at[0, 0:HIDDEN_SIZE].set(params["fc1_b"])
    for l in range(NUM_LAYERS):
        bih = params[f"b_ih_{l}"]
        bhh = params[f"b_hh_{l}"]
        folded = jnp.concatenate([bih[0:2 * H] + bhh[0:2 * H], bih[2 * H:3 * H]])
        b = b.at[1 + 2 * l, 0:3 * H].set(folded)
        b = b.at[2 + 2 * l, 0:H].set(bhh[2 * H:3 * H])
    b = b.at[1 + 2 * NUM_LAYERS, 0:ACTION_DIM].set(params["fc2_b"])
    # bf16 weights: MXU-native on v5e/v6e/v7x, halves the resident-slab bytes
    # and avoids the 3-6x multi-pass f32 MXU push cost.
    return jax.device_put(w.astype(jnp.bfloat16)), jax.device_put(b)


@jax.jit
def policy_forward(x, w_slab, b_slab):
    """Returns (action_probs (B, A), hidden_state (L, B, H)) like the torch module."""
    B = x.shape[0]
    # Adaptive batch tiling: one full-size tile for small batches, 512-row
    # tiles (pipelined, and "parallel" so they core-shard on v7x) for large.
    if B <= MAX_B_TILE:
        bp = _round_up(B, 8)
        b_tile = bp
    else:
        bp = _round_up(B, MAX_B_TILE)
        b_tile = MAX_B_TILE
    if bp != B:  # pad batch; padded rows are computed then discarded
        x = jnp.pad(x, ((0, bp - B), (0, 0)))

    kernel = functools.partial(
        _policy_gru_kernel,
        num_layers=NUM_LAYERS, state_dim=STATE_DIM, hidden_size=HIDDEN_SIZE,
        gru_hidden=GRU_HIDDEN, action_dim=ACTION_DIM, out_width=LANE)

    out = pl.pallas_call(
        kernel,
        out_shape=jax.ShapeDtypeStruct((bp, LANE), jnp.float32),
        grid_spec=pltpu.PrefetchScalarGridSpec(
            num_scalar_prefetch=0,
            grid=(bp // b_tile,),
            in_specs=[
                pl.BlockSpec((b_tile, STATE_DIM), lambda i: (i, 0)),
                pl.BlockSpec(w_slab.shape, lambda i: (0, 0)),   # resident weights
                pl.BlockSpec(b_slab.shape, lambda i: (0, 0)),   # resident biases
            ],
            out_specs=pl.BlockSpec((b_tile, LANE), lambda i: (i, 0)),
        ),
        compiler_params=pltpu.CompilerParams(
            dimension_semantics=("parallel",)),   # batch tiles shard across TCs on v7x
    )(x, w_slab, b_slab)

    hidden = out[:B, 0:NUM_LAYERS * GRU_HIDDEN]
    hidden = hidden.reshape(B, NUM_LAYERS, GRU_HIDDEN).transpose(1, 0, 2)
    probs = out[:B, NUM_LAYERS * GRU_HIDDEN:NUM_LAYERS * GRU_HIDDEN + ACTION_DIM]
    return probs, hidden


def reference_forward(x, params):
    """Pure-JAX f32 reference of the torch forward (hidden_state=None path)."""
    # TODO(synk): warm-start hidden_state / multi-timestep GRU path is not
    # implemented in the kernel (the module's default call never exercises it).
    H = GRU_HIDDEN
    inp = jnp.maximum(x @ params["fc1_w"].T + params["fc1_b"], 0.0)
    hs = []
    for l in range(NUM_LAYERS):
        h_prev = jnp.zeros((x.shape[0], H), jnp.float32)
        gi = inp @ params[f"w_ih_{l}"].T + params[f"b_ih_{l}"]
        gh = h_prev @ params[f"w_hh_{l}"].T + params[f"b_hh_{l}"]
        r = jax.nn.sigmoid(gi[:, 0:H] + gh[:, 0:H])
        z = jax.nn.sigmoid(gi[:, H:2 * H] + gh[:, H:2 * H])
        n = jnp.tanh(gi[:, 2 * H:3 * H] + r * gh[:, 2 * H:3 * H])
        h_new = (1.0 - z) * n + z * h_prev
        hs.append(h_new)
        inp = h_new
    logits = inp @ params["fc2_w"].T + params["fc2_b"]
    return jax.nn.softmax(logits, axis=-1), jnp.stack(hs, axis=0)


if __name__ == "__main__":
    key = jax.random.PRNGKey(0)
    k_param, k_x, k_big = jax.random.split(key, 3)
    params = init_params(k_param)
    w_slab, b_slab = pack_params(params)            # one-time packing, outside jit

    # --- small demo batch -------------------------------------------------
    x = jax.random.normal(k_x, (BATCH, STATE_DIM), jnp.float32)
    probs, hidden = policy_forward(x, w_slab, b_slab)
    jax.block_until_ready((probs, hidden))

    assert probs.shape == (BATCH, ACTION_DIM)
    assert hidden.shape == (NUM_LAYERS, BATCH, GRU_HIDDEN)

    ref_probs, ref_hidden = reference_forward(x, params)
    # exact softmax division => tight sum-to-1; bf16 MXU weights => ~1e-2 vs f32 ref
    assert bool(jnp.all(jnp.abs(jnp.sum(probs, axis=-1) - 1.0) < 1e-5))
    assert bool(jnp.max(jnp.abs(probs - ref_probs)) < 3e-2)
    assert bool(jnp.max(jnp.abs(hidden - ref_hidden)) < 3e-2)

    # --- batch-padding path (B not a multiple of the sublane tile) --------
    p2, h2 = policy_forward(x[:2], w_slab, b_slab)
    jax.block_until_ready((p2, h2))
    assert p2.shape == (2, ACTION_DIM) and h2.shape == (NUM_LAYERS, 2, GRU_HIDDEN)
    assert bool(jnp.max(jnp.abs(p2 - ref_probs[:2])) < 3e-2)

    # --- large batch: multi-tile grid, 512-row tiles, padding to tile ------
    xb = jax.random.normal(k_big, (1000, STATE_DIM), jnp.float32)
    pb, hb = policy_forward(xb, w_slab, b_slab)
    jax.block_until_ready((pb, hb))
    rb_p, rb_h = reference_forward(xb, params)
    assert pb.shape == (1000, ACTION_DIM) and hb.shape == (NUM_LAYERS, 1000, GRU_HIDDEN)
    assert bool(jnp.all(jnp.abs(jnp.sum(pb, axis=-1) - 1.0) < 1e-5))
    assert bool(jnp.max(jnp.abs(pb - rb_p)) < 3e-2)
    assert bool(jnp.max(jnp.abs(hb - rb_h)) < 3e-2)

    print("KERNEL_OK")
</pallas_src>

<mosaic_0001>
module attributes {stable_mosaic.version = 11 : i64} {
  func.func @_policy_gru_kernel(%arg0: i32, %arg1: memref<8x16xf32, #tpu.memory_space<vmem>>, %arg2: memref<112x128xbf16, #tpu.memory_space<vmem>>, %arg3: memref<8x128xf32, #tpu.memory_space<vmem>>, %arg4: memref<8x128xf32, #tpu.memory_space<vmem>>) attributes {dimension_semantics = [#tpu.dimension_semantics<parallel>], iteration_bounds = array<i64: 1>, scalar_prefetch = 0 : i64, scratch_operands = 0 : i64, tpu.core_type = #tpu.core_type<tc>, window_params = [{transform_indices = @transform_0, window_bounds = array<i64: 8, 16>}, {pipeline_mode = #tpu.pipeline_mode<synchronous>, transform_indices = @transform_1, window_bounds = array<i64: 112, 128>}, {pipeline_mode = #tpu.pipeline_mode<synchronous>, transform_indices = @transform_2, window_bounds = array<i64: 8, 128>}, {transform_indices = @transform_3, window_bounds = array<i64: 8, 128>}]} {
    %c0 = arith.constant 0 : index
    %c0_0 = arith.constant 0 : index
    %0 = vector.load %arg1[%c0, %c0_0] : memref<8x16xf32, #tpu.memory_space<vmem>>, vector<8x16xf32>
    %1 = arith.truncf %0 : vector<8x16xf32> to vector<8x16xbf16>
    %c0_1 = arith.constant 0 : index
    %c0_2 = arith.constant 0 : index
    %2 = vector.load %arg2[%c0_1, %c0_2] : memref<112x128xbf16, #tpu.memory_space<vmem>>, vector<16x32xbf16>
    %c0_3 = arith.constant 0 : index
    %c0_4 = arith.constant 0 : index
    %3 = vector.load %arg3[%c0_3, %c0_4] : memref<8x128xf32, #tpu.memory_space<vmem>>, vector<1x32xf32>
    %cst = arith.constant dense<0.000000e+00> : vector<8x32xf32>
    %4 = tpu.matmul %1, %2, %cst {dimension_numbers = #tpu.dot_dimension_numbers<[1], [0], [0], [1], [0, 0, 1, 1], [], []>} : vector<8x16xbf16>, vector<16x32xbf16>, vector<8x32xf32> -> vector<8x32xf32>
    %5 = vector.broadcast %3 : vector<1x32xf32> to vector<8x32xf32>
    %6 = arith.addf %4, %5 : vector<8x32xf32>
    %cst_5 = arith.constant 0.000000e+00 : f32
    %7 = vector.broadcast %cst_5 : f32 to vector<8x32xf32>
    %8 = arith.maximumf %6, %7 : vector<8x32xf32>
    %c16 = arith.constant 16 : index
    %c0_6 = arith.constant 0 : index
    %9 = vector.load %arg2[%c16, %c0_6] : memref<112x128xbf16, #tpu.memory_space<vmem>>, vector<32x96xbf16>
    %c1 = arith.constant 1 : index
    %c0_7 = arith.constant 0 : index
    %10 = vector.load %arg3[%c1, %c0_7] : memref<8x128xf32, #tpu.memory_space<vmem>>, vector<1x96xf32>
    %c2 = arith.constant 2 : index
    %c0_8 = arith.constant 0 : index
    %11 = vector.load %arg3[%c2, %c0_8] : memref<8x128xf32, #tpu.memory_space<vmem>>, vector<1x32xf32>
    %12 = arith.truncf %8 : vector<8x32xf32> to vector<8x32xbf16>
    %cst_9 = arith.constant dense<0.000000e+00> : vector<8x96xf32>
    %13 = tpu.matmul %12, %9, %cst_9 {dimension_numbers = #tpu.dot_dimension_numbers<[1], [0], [0], [1], [0, 0, 1, 1], [], []>} : vector<8x32xbf16>, vector<32x96xbf16>, vector<8x96xf32> -> vector<8x96xf32>
    %14 = vector.broadcast %10 : vector<1x96xf32> to vector<8x96xf32>
    %15 = arith.addf %13, %14 : vector<8x96xf32>
    %16 = vector.extract_strided_slice %15 {offsets = [0, 0], sizes = [8, 64], strides = [1, 1]} : vector<8x96xf32> to vector<8x64xf32>
    %17 = arith.negf %16 : vector<8x64xf32>
    %18 = math.exp %17 : vector<8x64xf32>
    %cst_10 = arith.constant 1.000000e+00 : f32
    %19 = vector.broadcast %cst_10 : f32 to vector<8x64xf32>
    %20 = arith.addf %19, %18 : vector<8x64xf32>
    %21 = arith.divf %19, %20 : vector<8x64xf32>
    %22 = vector.extract_strided_slice %21 {offsets = [0, 0], sizes = [8, 32], strides = [1, 1]} : vector<8x64xf32> to vector<8x32xf32>
    %23 = vector.extract_strided_slice %21 {offsets = [0, 32], sizes = [8, 32], strides = [1, 1]} : vector<8x64xf32> to vector<8x32xf32>
    %24 = vector.extract_strided_slice %15 {offsets = [0, 64], sizes = [8, 32], strides = [1, 1]} : vector<8x96xf32> to vector<8x32xf32>
    %25 = vector.broadcast %11 : vector<1x32xf32> to vector<8x32xf32>
    %26 = arith.mulf %22, %25 : vector<8x32xf32>
    %27 = arith.addf %24, %26 : vector<8x32xf32>
    %28 = math.tanh %27 : vector<8x32xf32>
    %cst_11 = arith.constant 1.000000e+00 : f32
    %29 = vector.broadcast %cst_11 : f32 to vector<8x32xf32>
    %30 = arith.subf %29, %23 : vector<8x32xf32>
    %31 = arith.mulf %30, %28 : vector<8x32xf32>
    %c48 = arith.constant 48 : index
    %c0_12 = arith.constant 0 : index
    %32 = vector.load %arg2[%c48, %c0_12] : memref<112x128xbf16, #tpu.memory_space<vmem>>, vector<32x96xbf16>
    %c3 = arith.constant 3 : index
    %c0_13 = arith.constant 0 : index
    %33 = vector.load %arg3[%c3, %c0_13] : memref<8x128xf32, #tpu.memory_space<vmem>>, vector<1x96xf32>
    %c4 = arith.constant 4 : index
    %c0_14 = arith.constant 0 : index
    %34 = vector.load %arg3[%c4, %c0_14] : memref<8x128xf32, #tpu.memory_space<vmem>>, vector<1x32xf32>
    %35 = arith.truncf %31 : vector<8x32xf32> to vector<8x32xbf16>
    %cst_15 = arith.constant dense<0.000000e+00> : vector<8x96xf32>
    %36 = tpu.matmul %35, %32, %cst_15 {dimension_numbers = #tpu.dot_dimension_numbers<[1], [0], [0], [1], [0, 0, 1, 1], [], []>} : vector<8x32xbf16>, vector<32x96xbf16>, vector<8x96xf32> -> vector<8x96xf32>
    %37 = vector.broadcast %33 : vector<1x96xf32> to vector<8x96xf32>
    %38 = arith.addf %36, %37 : vector<8x96xf32>
    %39 = vector.extract_strided_slice %38 {offsets = [0, 0], sizes = [8, 64], strides = [1, 1]} : vector<8x96xf32> to vector<8x64xf32>
    %40 = arith.negf %39 : vector<8x64xf32>
    %41 = math.exp %40 : vector<8x64xf32>
    %cst_16 = arith.constant 1.000000e+00 : f32
    %42 = vector.broadcast %cst_16 : f32 to vector<8x64xf32>
    %43 = arith.addf %42, %41 : vector<8x64xf32>
    %44 = arith.divf %42, %43 : vector<8x64xf32>
    %45 = vector.extract_strided_slice %44 {offsets = [0, 0], sizes = [8, 32], strides = [1, 1]} : vector<8x64xf32> to vector<8x32xf32>
    %46 = vector.extract_strided_slice %44 {offsets = [0, 32], sizes = [8, 32], strides = [1, 1]} : vector<8x64xf32> to vector<8x32xf32>
    %47 = vector.extract_strided_slice %38 {offsets = [0, 64], sizes = [8, 32], strides = [1, 1]} : vector<8x96xf32> to vector<8x32xf32>
    %48 = vector.broadcast %34 : vector<1x32xf32> to vector<8x32xf32>
    %49 = arith.mulf %45, %48 : vector<8x32xf32>
    %50 = arith.addf %47, %49 : vector<8x32xf32>
    %51 = math.tanh %50 : vector<8x32xf32>
    %cst_17 = arith.constant 1.000000e+00 : f32
    %52 = vector.broadcast %cst_17 : f32 to vector<8x32xf32>
    %53 = arith.subf %52, %46 : vector<8x32xf32>
    %54 = arith.mulf %53, %51 : vector<8x32xf32>
    %c80 = arith.constant 80 : index
    %c0_18 = arith.constant 0 : index
    %55 = vector.load %arg2[%c80, %c0_18] : memref<112x128xbf16, #tpu.memory_space<vmem>>, vector<32x8xbf16>
    %c5 = arith.constant 5 : index
    %c0_19 = arith.constant 0 : index
    %56 = vector.load %arg3[%c5, %c0_19] : memref<8x128xf32, #tpu.memory_space<vmem>>, vector<1x8xf32>
    %57 = arith.truncf %54 : vector<8x32xf32> to vector<8x32xbf16>
    %cst_20 = arith.constant dense<0.000000e+00> : vector<8x8xf32>
    %58 = tpu.matmul %57, %55, %cst_20 {dimension_numbers = #tpu.dot_dimension_numbers<[1], [0], [0], [1], [0, 0, 1, 1], [], []>} : vector<8x32xbf16>, vector<32x8xbf16>, vector<8x8xf32> -> vector<8x8xf32>
    %59 = vector.broadcast %56 : vector<1x8xf32> to vector<8x8xf32>
    %60 = arith.addf %58, %59 : vector<8x8xf32>
    %cst_21 = arith.constant dense<0xFF800000> : vector<8xf32>
    %61 = vector.multi_reduction <maximumf>, %60, %cst_21 [1] : vector<8x8xf32> to vector<8xf32>
    %62 = vector.shape_cast %61 : vector<8xf32> to vector<8x1xf32>
    %63 = vector.broadcast %62 : vector<8x1xf32> to vector<8x8xf32>
    %64 = arith.subf %60, %63 : vector<8x8xf32>
    %65 = math.exp %64 : vector<8x8xf32>
    %cst_22 = arith.constant dense<0.000000e+00> : vector<8xf32>
    %66 = vector.multi_reduction <add>, %65, %cst_22 [1] : vector<8x8xf32> to vector<8xf32>
    %67 = vector.shape_cast %66 : vector<8xf32> to vector<8x1xf32>
    %68 = vector.broadcast %67 : vector<8x1xf32> to vector<8x8xf32>
    %69 = arith.divf %65, %68 : vector<8x8xf32>
    %70 = vector.extract_strided_slice %54 {offsets = [0, 0], sizes = [8, 24], strides = [1, 1]} : vector<8x32xf32> to vector<8x24xf32>
    %71 = tpu.concatenate %31, %54, %69, %31, %70 in 1 : vector<8x32xf32>, vector<8x32xf32>, vector<8x8xf32>, vector<8x32xf32>, vector<8x24xf32> -> vector<8x128xf32>
    %c0_23 = arith.constant 0 : index
    %c0_24 = arith.constant 0 : index
    %72 = vector.load %arg4[%c0_23, %c0_24] : memref<8x128xf32, #tpu.memory_space<vmem>>, vector<8x128xf32>
    tpu.vector_store %arg4[%c0_23, %c0_24], %71 {strides = array<i32>} : memref<8x128xf32, #tpu.memory_space<vmem>>, vector<8x128xf32>,
    return
  }
  func.func @transform_0(%arg0: i32) -> (i32, i32) {
    %c0_i32 = arith.constant 0 : i32
    %c0_i32_0 = arith.constant 0 : i32
    return %arg0, %c0_i32 : i32, i32
  }
  func.func @transform_1(%arg0: i32) -> (i32, i32) {
    %c0_i32 = arith.constant 0 : i32
    %c0_i32_0 = arith.constant 0 : i32
    %c0_i32_1 = arith.constant 0 : i32
    return %c0_i32, %c0_i32_0 : i32, i32
  }
  func.func @transform_2(%arg0: i32) -> (i32, i32) {
    %c0_i32 = arith.constant 0 : i32
    %c0_i32_0 = arith.constant 0 : i32
    %c0_i32_1 = arith.constant 0 : i32
    return %c0_i32, %c0_i32_0 : i32, i32
  }
  func.func @transform_3(%arg0: i32) -> (i32, i32) {
    %c0_i32 = arith.constant 0 : i32
    %c0_i32_0 = arith.constant 0 : i32
    return %arg0, %c0_i32 : i32, i32
  }
}

</mosaic_0001>

<llo_original>
// kernel: policy_forward.1
$region0: #{policy_forward.1}
  #allocation0 [shape = 'u32[]', space=smem, size = 0x4, offset = 0x4, fixed_abs, tag = 'smem constant byte address 0x4 - core index']
  #allocation1 [shape = 'u32[144,128]{1,0:T(1,128)}', space=vmem, size = 0x12000, scoped, tag = 'internal scratch']
  %s0 = inlined_call_operand.hbm [shape: f32[8,16], index: 0, kind: input, shape index: {}]
  %s1 = inlined_call_operand.hbm [shape: bf16[112,128], index: 1, kind: input, shape index: {}]
  %s2 = inlined_call_operand.hbm [shape: f32[8,128], index: 2, kind: input, shape index: {}]
  %s3 = inlined_call_operand.vmem [shape: f32[8,128], index: 3, kind: output, shape index: {}]
  %s4 = sld [smem:[#allocation0]]
  $region34: #{policy_forward.1} parent=0
    _
  %s6 = ssub.s32 1, %s4
  %s7 = scalar_select 0, %s6, %s4
  $region1: #{policy_forward.1} parent=0
    #allocation2 [shape = 'u8[4096]{0}', space=vmem, size = 0x1000, scoped, tag = 'input window, operand 0, single buffered']
    #allocation3 [shape = 's32[1]{0}', space=sflag, size = 0x4, scoped, tag = 'scoped memory for policy_forward.1']
    #allocation4 [shape = 'u8[28672]{0}', space=vmem, size = 0x7000, scoped, tag = 'input window, operand 1, single buffered']
    #allocation5 [shape = 's32[1]{0}', space=sflag, size = 0x4, scoped, tag = 'scoped memory for policy_forward.1']
    #allocation6 [shape = 'u8[4096]{0}', space=vmem, size = 0x1000, scoped, tag = 'input window, operand 2, single buffered']
    %8 = vsyncpa [#allocation3], 0
    %9 = vsyncpa [#allocation5], 0
    // Predicated region
    $region2: #{policy_forward.1} parent=1 // pred_check
      _
    $region3: #{policy_forward.1} parent=1 // pred_check_branch
      %11 = sbr.rel (0) target = $region5
    $region4: #{policy_forward.1} parent=1 // pred_region
      %s13 = ssub.s32 128, 128
      %14 = vsyncadd [#allocation3], %s13
      %s16 = sshll.u32 [#allocation2], 4
      %s17 = int_to_ptr.vmem [resolvable:$true] %s16
      %19 = dma.hbm_to_vmem [thread:$0]  %s0, 128, %s17, [#allocation3]
    $region5: #{policy_forward.1} parent=1 // pred_fallthru
      _
    // Predicated region
    $region6: #{policy_forward.1} parent=1 // pred_check
      _
    $region7: #{policy_forward.1} parent=1 // pred_check_branch
      %21 = sbr.rel (0) target = $region9
    $region8: #{policy_forward.1} parent=1 // pred_region
      %s23 = ssub.s32 896, 896
      %24 = vsyncadd [#allocation5], %s23
      %s25 = sshll.u32 [#allocation4], 4
      %s26 = int_to_ptr.vmem [resolvable:$true] %s25
      %31 = dma.hbm_to_vmem [thread:$0]  %s1, 896, %s26, [#allocation5], 64, 64, 4
    $region9: #{policy_forward.1} parent=1 // pred_fallthru
      _
    // Predicated region
    $region10: #{policy_forward.1} parent=1 // pred_check
      _
    $region11: #{policy_forward.1} parent=1 // pred_check_branch
      %33 = sbr.rel (0) target = $region13
    $region12: #{policy_forward.1} parent=1 // pred_region
      %s35 = ssub.s32 128, 128
      %36 = vsyncadd [#allocation5], %s35
      %s38 = sshll.u32 [#allocation6], 4
      %s39 = int_to_ptr.vmem [resolvable:$true] %s38
      %41 = dma.hbm_to_vmem [thread:$0]  %s2, 128, %s39, [#allocation5]
    $region13: #{policy_forward.1} parent=1 // pred_fallthru
      _
    // Predicated region
    $region14: #{policy_forward.1} parent=1 // pred_check
      _
    $region15: #{policy_forward.1} parent=1 // pred_check_branch
      %43 = sbr.rel (0) target = $region17
    $region16: #{policy_forward.1} parent=1 // pred_region
      %44 = dma.done [#allocation3], 128
    $region17: #{policy_forward.1} parent=1 // pred_fallthru
      _
    // Predicated region
    $region18: #{policy_forward.1} parent=1 // pred_check
      _
    $region19: #{policy_forward.1} parent=1 // pred_check_branch
      %46 = sbr.rel (0) target = $region21
    $region20: #{policy_forward.1} parent=1 // pred_region
      %47 = dma.done [#allocation5], 896
    $region21: #{policy_forward.1} parent=1 // pred_fallthru
      _
    // Predicated region
    $region22: #{policy_forward.1} parent=1 // pred_check
      _
    $region23: #{policy_forward.1} parent=1 // pred_check_branch
      %49 = sbr.rel (0) target = $region25
    $region24: #{policy_forward.1} parent=1 // pred_region
      %50 = dma.done [#allocation5], 128
    $region25: #{policy_forward.1} parent=1 // pred_fallthru
      _
    %v52 = vld [vmem:[#allocation2] sm:$0xff]
    %v53 = vpack.c.bf16 %v52, %v52
    %v54 = vld [vmem:[#allocation4] sm:$0xf]
    %v55 = vld [vmem:[#allocation4 + $0x4] sm:$0xf]
    %v56 = vld [vmem:[#allocation6] sm:$0x1]
    %v57 = vlaneseq
    %v58 = vshrl.u32 %v57, 7
    %v59 = vsub.s32 0, %v58
    %v60 = vrot.slane %v56, %v59
    %v63 = vunpack.c.l.b16 %v54
    %v64 = vunpack.c.l.b16 %v55
    %v65 = vpack.c.b16 %v64, %v63
    %vm67 = vcmask 130048
    %v69 = vsel %vm67, %v53, 0
    %71 = vmatprep.subr.bf16.mxu0 0
    %72 = vmatpush1.bf16.msra.mxu0 %v65
    %73 = vmatprep.subr.bf16.mxu0 0
    %74 = vmatpush1.bf16.msra.mxu0 0
    %75 = vmatprep.subr.bf16.mxu0 0
    %76 = vmatpush1.bf16.msra.mxu0 0
    %77 = vmatprep.subr.bf16.mxu0 0
    %78 = vmatpush1.bf16.msra.mxu0 0
    %79 = vmatprep.subr.bf16.mxu0 0
    %80 = vmatpush1.bf16.msra.mxu0 0
    %81 = vmatprep.subr.bf16.mxu0 0
    %82 = vmatpush1.bf16.msra.mxu0 0
    %83 = vmatprep.subr.bf16.mxu0 0
    %84 = vmatpush1.bf16.msra.mxu0 0
    %85 = vmatprep.subr.bf16.mxu0 0
    %86 = vmatpush1.bf16.msra.mxu0 0
    %87 = vmatprep.subr.bf16.mxu0 0
    %88 = vmatpush1.bf16.msra.mxu0 0
    %89 = vmatprep.subr.bf16.mxu0 0
    %90 = vmatpush1.bf16.msra.mxu0 0
    %91 = vmatprep.subr.bf16.mxu0 0
    %92 = vmatpush1.bf16.msra.mxu0 0
    %93 = vmatprep.subr.bf16.mxu0 0
    %94 = vmatpush1.bf16.msra.mxu0 0
    %95 = vmatprep.subr.bf16.mxu0 0
    %96 = vmatpush1.bf16.msra.mxu0 0
    %97 = vmatprep.subr.bf16.mxu0 0
    %98 = vmatpush1.bf16.msra.mxu0 0
    %99 = vmatprep.subr.bf16.mxu0 0
    %100 = vmatpush1.bf16.msra.mxu0 0
    %101 = vmatprep.subr.bf16.mxu0 0
    %102 = vmatpush1.bf16.msra.mxu0 0
    %103 = vmatprep.mubr.bf16.mxu0 0
    %104 = vmatmul.mubr.bf16.gmra.mrb[0].mxu0 %v69
    %v105 = vpop.f32.mrb[0].mxu0
    %v106 = vadd.f32 %v60, %v105
    %v107 = vpop.f32.mrb[0].mxu0
    %v108 = vpop.f32.mrb[0].mxu0
    %v109 = vpop.f32.mrb[0].mxu0
    %110 = vdwg.mxu0
    %v111 = vmax.f32 %v106, 0.0
    %v112 = vld [vmem:[#allocation4 + $0x8] sm:$0xf]
    %v113 = vld [vmem:[#allocation4 + $0xc] sm:$0xf]
    %v114 = vld [vmem:[#allocation4 + $0x10] sm:$0xf]
    %v115 = vld [vmem:[#allocation4 + $0x14] sm:$0xf]
    %v116 = vld [vmem:[#allocation6 + $0x1] sm:$0x1]
    %v117 = vld [vmem:[#allocation6 + $0x2] sm:$0x1]
    %v118 = vpack.c.bf16 %v111, %v111
    %v119 = vlaneseq
    %v120 = vshrl.u32 %v119, 7
    %v121 = vsub.s32 0, %v120
    %v122 = vrot.slane %v116, %v121
    %v127 = vunpack.c.l.b16 %v112
    %v128 = vunpack.c.l.b16 %v113
    %v129 = vunpack.c.l.b16 %v114
    %v130 = vunpack.c.l.b16 %v115
    %v131 = vpack.c.b16 %v128, %v127
    %v132 = vpack.c.b16 %v130, %v129
    %vm135 = vcmask 261120
    %v137 = vsel %vm135, %v118, 0
    %139 = vmatprep.subr.bf16.mxu0 0
    %140 = vmatpush1.bf16.msra.mxu0 %v131
    %141 = vmatprep.subr.bf16.mxu0 0
    %142 = vmatpush1.bf16.msra.mxu0 %v132
    %143 = vmatprep.subr.bf16.mxu0 0
    %144 = vmatpush1.bf16.msra.mxu0 0
    %145 = vmatprep.subr.bf16.mxu0 0
    %146 = vmatpush1.bf16.msra.mxu0 0
    %147 = vmatprep.subr.bf16.mxu0 0
    %148 = vmatpush1.bf16.msra.mxu0 0
    %149 = vmatprep.subr.bf16.mxu0 0
    %150 = vmatpush1.bf16.msra.mxu0 0
    %151 = vmatprep.subr.bf16.mxu0 0
    %152 = vmatpush1.bf16.msra.mxu0 0
    %153 = vmatprep.subr.bf16.mxu0 0
    %154 = vmatpush1.bf16.msra.mxu0 0
    %155 = vmatprep.subr.bf16.mxu0 0
    %156 = vmatpush1.bf16.msra.mxu0 0
    %157 = vmatprep.subr.bf16.mxu0 0
    %158 = vmatpush1.bf16.msra.mxu0 0
    %159 = vmatprep.subr.bf16.mxu0 0
    %160 = vmatpush1.bf16.msra.mxu0 0
    %161 = vmatprep.subr.bf16.mxu0 0
    %162 = vmatpush1.bf16.msra.mxu0 0
    %163 = vmatprep.subr.bf16.mxu0 0
    %164 = vmatpush1.bf16.msra.mxu0 0
    %165 = vmatprep.subr.bf16.mxu0 0
    %166 = vmatpush1.bf16.msra.mxu0 0
    %167 = vmatprep.subr.bf16.mxu0 0
    %168 = vmatpush1.bf16.msra.mxu0 0
    %169 = vmatprep.subr.bf16.mxu0 0
    %170 = vmatpush1.bf16.msra.mxu0 0
    %171 = vmatprep.mubr.bf16.mxu0 0
    %172 = vmatmul.mubr.bf16.gmra.mrb[0].mxu0 %v137
    %v173 = vpop.f32.mrb[0].mxu0
    %v174 = vadd.f32 %v122, %v173
    %v175 = vpop.f32.mrb[0].mxu0
    %v176 = vpop.f32.mrb[0].mxu0
    %v177 = vpop.f32.mrb[0].mxu0
    %178 = vdwg.mxu0
    %v179 = vxor.u32 %v174, 2147483648
    %v180 = vmul.f32 %v179, 1.442695
    %v181 = vpow.pop %v180
    %v182 = vadd.f32 %v181, 1.0
    %v183 = vrcp.pop %v182
    %v184 = vmul.f32 1.0, %v183
    %v185 = vlaneseq
    %v186 = vshrl.u32 %v185, 7
    %v187 = vsub.s32 0, %v186
    %v188 = vrot.slane %v117, %v187
    %v189 = vmul.f32 %v184, %v188
    %191 = vrot.lane.b32.xlu0 %v189, 64
    %v192 = vpop.permute.xlu0 %191
    %v194 = vadd.f32 %v174, %v192
    %v195 = vtanh.pop %v194
    %v196 = vsub.f32 1.0, %v184
    %198 = vrot.lane.b32.xlu0 %v195, 96
    %v199 = vpop.permute.xlu0 %198
    %v201 = vmul.f32 %v196, %v199
    %v202 = vld [vmem:[#allocation4 + $0x18] sm:$0xf]
    %v203 = vld [vmem:[#allocation4 + $0x1c] sm:$0xf]
    %v204 = vld [vmem:[#allocation4 + $0x20] sm:$0xf]
    %v205 = vld [vmem:[#allocation4 + $0x24] sm:$0xf]
    %v206 = vld [vmem:[#allocation6 + $0x3] sm:$0x1]
    %v207 = vld [vmem:[#allocation6 + $0x4] sm:$0x1]
    %v208 = vpack.c.bf16 %v201, %v201
    %v209 = vlaneseq
    %v210 = vshrl.u32 %v209, 7
    %v211 = vsub.s32 0, %v210
    %v212 = vrot.slane %v206, %v211
    %214 = vrot.lane.b32.xlu0 %v208, 96
    %v215 = vpop.permute.xlu0 %214
    %v220 = vunpack.c.l.b16 %v202
    %v221 = vunpack.c.l.b16 %v203
    %v222 = vunpack.c.l.b16 %v204
    %v223 = vunpack.c.l.b16 %v205
    %v224 = vpack.c.b16 %v221, %v220
    %v225 = vpack.c.b16 %v223, %v222
    %v229 = vsel %vm135, %v215, 0
    %231 = vmatprep.subr.bf16.mxu0 0
    %232 = vmatpush1.bf16.msra.mxu0 %v224
    %233 = vmatprep.subr.bf16.mxu0 0
    %234 = vmatpush1.bf16.msra.mxu0 %v225
    %235 = vmatprep.subr.bf16.mxu0 0
    %236 = vmatpush1.bf16.msra.mxu0 0
    %237 = vmatprep.subr.bf16.mxu0 0
    %238 = vmatpush1.bf16.msra.mxu0 0
    %239 = vmatprep.subr.bf16.mxu0 0
    %240 = vmatpush1.bf16.msra.mxu0 0
    %241 = vmatprep.subr.bf16.mxu0 0
    %242 = vmatpush1.bf16.msra.mxu0 0
    %243 = vmatprep.subr.bf16.mxu0 0
    %244 = vmatpush1.bf16.msra.mxu0 0
    %245 = vmatprep.subr.bf16.mxu0 0
    %246 = vmatpush1.bf16.msra.mxu0 0
    %247 = vmatprep.subr.bf16.mxu0 0
    %248 = vmatpush1.bf16.msra.mxu0 0
    %249 = vmatprep.subr.bf16.mxu0 0
    %250 = vmatpush1.bf16.msra.mxu0 0
    %251 = vmatprep.subr.bf16.mxu0 0
    %252 = vmatpush1.bf16.msra.mxu0 0
    %253 = vmatprep.subr.bf16.mxu0 0
    %254 = vmatpush1.bf16.msra.mxu0 0
    %255 = vmatprep.subr.bf16.mxu0 0
    %256 = vmatpush1.bf16.msra.mxu0 0
    %257 = vmatprep.subr.bf16.mxu0 0
    %258 = vmatpush1.bf16.msra.mxu0 0
    %259 = vmatprep.subr.bf16.mxu0 0
    %260 = vmatpush1.bf16.msra.mxu0 0
    %261 = vmatprep.subr.bf16.mxu0 0
    %262 = vmatpush1.bf16.msra.mxu0 0
    %263 = vmatprep.mubr.bf16.mxu0 0
    %264 = vmatmul.mubr.bf16.gmra.mrb[0].mxu0 %v229
    %v265 = vpop.f32.mrb[0].mxu0
    %v266 = vadd.f32 %v212, %v265
    %v267 = vpop.f32.mrb[0].mxu0
    %v268 = vpop.f32.mrb[0].mxu0
    %v269 = vpop.f32.mrb[0].mxu0
    %270 = vdwg.mxu0
    %v271 = vxor.u32 %v266, 2147483648
    %v272 = vmul.f32 %v271, 1.442695
    %v273 = vpow.pop %v272
    %v274 = vadd.f32 %v273, 1.0
    %v275 = vrcp.pop %v274
    %v276 = vmul.f32 1.0, %v275
    %v277 = vlaneseq
    %v278 = vshrl.u32 %v277, 7
    %v279 = vsub.s32 0, %v278
    %v280 = vrot.slane %v207, %v279
    %v281 = vmul.f32 %v276, %v280
    %283 = vrot.lane.b32.xlu0 %v281, 64
    %v284 = vpop.permute.xlu0 %283
    %v286 = vadd.f32 %v266, %v284
    %v287 = vtanh.pop %v286
    %v288 = vsub.f32 1.0, %v276
    %290 = vrot.lane.b32.xlu0 %v287, 96
    %v291 = vpop.permute.xlu0 %290
    %v293 = vmul.f32 %v288, %v291
    %v294 = vld [vmem:[#allocation4 + $0x28] sm:$0xf]
    %v295 = vld [vmem:[#allocation4 + $0x2c] sm:$0xf]
    %v296 = vld [vmem:[#allocation4 + $0x30] sm:$0xf]
    %v297 = vld [vmem:[#allocation4 + $0x34] sm:$0xf]
    %v298 = vld [vmem:[#allocation6 + $0x5] sm:$0x1]
    %v299 = vpack.c.bf16 %v293, %v293
    %v300 = vlaneseq
    %v301 = vshrl.u32 %v300, 7
    %v302 = vsub.s32 0, %v301
    %v303 = vrot.slane %v298, %v302
    %305 = vrot.lane.b32.xlu0 %v299, 96
    %v306 = vpop.permute.xlu0 %305
    %v311 = vunpack.c.l.b16 %v294
    %v312 = vunpack.c.l.b16 %v295
    %v313 = vunpack.c.l.b16 %v296
    %v314 = vunpack.c.l.b16 %v297
    %v315 = vpack.c.b16 %v312, %v311
    %v316 = vpack.c.b16 %v314, %v313
    %v320 = vsel %vm135, %v306, 0
    %322 = vmatprep.subr.bf16.mxu0 0
    %323 = vmatpush1.bf16.msra.mxu0 %v315
    %324 = vmatprep.subr.bf16.mxu0 0
    %325 = vmatpush1.bf16.msra.mxu0 %v316
    %326 = vmatprep.subr.bf16.mxu0 0
    %327 = vmatpush1.bf16.msra.mxu0 0
    %328 = vmatprep.subr.bf16.mxu0 0
    %329 = vmatpush1.bf16.msra.mxu0 0
    %330 = vmatprep.subr.bf16.mxu0 0
    %331 = vmatpush1.bf16.msra.mxu0 0
    %332 = vmatprep.subr.bf16.mxu0 0
    %333 = vmatpush1.bf16.msra.mxu0 0
    %334 = vmatprep.subr.bf16.mxu0 0
    %335 = vmatpush1.bf16.msra.mxu0 0
    %336 = vmatprep.subr.bf16.mxu0 0
    %337 = vmatpush1.bf16.msra.mxu0 0
    %338 = vmatprep.subr.bf16.mxu0 0
    %339 = vmatpush1.bf16.msra.mxu0 0
    %340 = vmatprep.subr.bf16.mxu0 0
    %341 = vmatpush1.bf16.msra.mxu0 0
    %342 = vmatprep.subr.bf16.mxu0 0
    %343 = vmatpush1.bf16.msra.mxu0 0
    %344 = vmatprep.subr.bf16.mxu0 0
    %345 = vmatpush1.bf16.msra.mxu0 0
    %346 = vmatprep.subr.bf16.mxu0 0
    %347 = vmatpush1.bf16.msra.mxu0 0
    %348 = vmatprep.subr.bf16.mxu0 0
    %349 = vmatpush1.bf16.msra.mxu0 0
    %350 = vmatprep.subr.bf16.mxu0 0
    %351 = vmatpush1.bf16.msra.mxu0 0
    %352 = vmatprep.subr.bf16.mxu0 0
    %353 = vmatpush1.bf16.msra.mxu0 0
    %354 = vmatprep.mubr.bf16.mxu0 0
    %355 = vmatmul.mubr.bf16.gmra.mrb[0].mxu0 %v320
    %v356 = vpop.f32.mrb[0].mxu0
    %v357 = vadd.f32 %v303, %v356
    %v358 = vpop.f32.mrb[0].mxu0
    %v359 = vpop.f32.mrb[0].mxu0
    %v360 = vpop.f32.mrb[0].mxu0
    %361 = vdwg.mxu0
    %vm362 = vcmask 64512
    %v363 = vsel %vm362, %v357, -inf
    %364 = vmax.xlane.f32.xlu0 %v363
    %v365 = vpop.xlane.xlu0 %364
    %v366 = vsub.f32 %v357, %v365
    %v367 = vmul.f32 %v366, 1.442695
    %v368 = vpow.pop %v367
    %v369 = vsel %vm362, %v368, 0.0
    %370 = vadd.xlane.f32.xlu0 %v369
    %v371 = vpop.xlane.xlu0 %370
    %v372 = vrcp.pop %v371
    %v373 = vmul.f32 %v368, %v372
    %375 = vrot.lane.b32.xlu0 %v201, 96
    %v376 = vpop.permute.xlu0 %375
    %379 = vrot.lane.b32.xlu0 %v373, 64
    %v380 = vpop.permute.xlu0 %379
    %382 = vrot.lane.b32.xlu0 %v201, 40
    %v383 = vpop.permute.xlu0 %382
    %386 = vrot.lane.b32.xlu0 %v293, 72
    %v387 = vpop.permute.xlu0 %386
    %v389 = vsel %vm135, %v376, %v293
    %vm390 = vcmask 523264
    %v391 = vsel %vm390, %v389, %v380
    %vm392 = vcmask 588800
    %v393 = vsel %vm392, %v391, %v383
    %vm394 = vcmask 850944
    %v395 = vsel %vm394, %v393, %v387
    %396 = vst [vmem:[%s3] sm:$0xff] %v395
    // Predicated region
    $region26: #{policy_forward.1} parent=1 // pred_check
      _
    $region27: #{policy_forward.1} parent=1 // pred_check_branch
      %398 = sbr.rel (0) target = $region29
    $region28: #{policy_forward.1} parent=1 // pred_region
      _
    $region29: #{policy_forward.1} parent=1 // pred_fallthru
      _
    // Predicated region
    $region30: #{policy_forward.1} parent=1 // pred_check
      _
    $region31: #{policy_forward.1} parent=1 // pred_check_branch
      %400 = sbr.rel (0) target = $region33
    $region32: #{policy_forward.1} parent=1 // pred_region
      _
    $region33: #{policy_forward.1} parent=1 // pred_fallthru
      _
    %401 = vsyncpa [#allocation3], 1
    %402 = vsyncpa [#allocation5], 1

</llo_original>
